<compile_context>
chip_gen: v6e
topology: v6e:2x2x1
jax: 0.10.0
libtpu: 0.0.40
codegen_flags: <defaults>
</compile_context>

<pallas_src>
import functools

import jax
import jax.numpy as jnp
from jax.experimental import pallas as pl
from jax.experimental.pallas import tpu as pltpu

MASK_FILL_VALUE = -10000.0


def _vmem_capacity_bytes():
    """Physical VMEM per core; conservative fallback if the query fails."""
    try:
        return int(pltpu.get_tpu_info().vmem_capacity_bytes)
    except Exception:
        return 64 * 1024 * 1024  # v7x-sized: safe lower bound everywhere


def _fused_scale_mask_softmax_kernel(x_ref, mask_ref, o_ref, *, scale, sk_valid,
                                     approx_reciprocal):
    # x_ref/o_ref: (1, Th, Tq, Skb); mask_ref: (1, 1, Tq, Skb) broadcast over heads.
    x = x_ref[...].astype(jnp.float32) * jnp.float32(scale)
    m = mask_ref[...] != 0
    # exact masked_fill semantics (cmp+select is free: kernel is HBM-bound)
    s = jnp.where(m, jnp.float32(MASK_FILL_VALUE), x)
    if sk_valid is not None:
        # Sk was padded in the wrapper: pad lanes get -inf so they contribute
        # exactly 0 to the denominator (even for fully-masked rows).
        lane = jax.lax.broadcasted_iota(jnp.int32, s.shape, dimension=s.ndim - 1)
        s = jnp.where(lane < sk_valid, s, -jnp.inf)

    # numerically-stable softmax over the last (lane) axis
    s_max = jnp.max(s, axis=-1, keepdims=True)
    e = jnp.exp(s - s_max)
    denom = jnp.sum(e, axis=-1, keepdims=True)
    if approx_reciprocal:
        out = e * pl.reciprocal(denom, approx=True)   # EUP slot, ~free
    else:
        out = e / denom
    o_ref[...] = out.astype(o_ref.dtype)


def _choose_tiles(H, Sq, skb, itemsize, target_bytes):
    """Pick (Th, Tq) so one x tile is ~target_bytes, with no Sq padding needed."""
    sub = max(8, 32 // itemsize)               # sublane unit (f32: 8, bf16: 16)
    row_bytes = skb * itemsize
    rows_target = max(1, target_bytes // row_bytes)
    if Sq <= rows_target or Sq <= sub:
        # short sequence: take all of Sq (== full dim, always layout-legal) and
        # fuse heads into the block; head grid uses cdiv so odd H is fine.
        tq = Sq
        th = int(max(1, min(H, rows_target // max(1, Sq))))
        return th, tq
    # long sequence: one head per block, tile Sq in sublane-aligned chunks;
    # the last (ragged) block is handled by Pallas boundary masking.
    th = 1
    tq = int(max(sub, (min(rows_target, Sq) // sub) * sub))
    return th, tq


def fused_scale_mask_softmax(x, mask, scale=1.0, *, target_block_bytes=None,
                             approx_reciprocal=True, alias_input=False):
    """x: (B, H, Sq, Sk); mask: (B, 1, Sq, Sk) with nonzero => masked out."""
    B, H, Sq, Sk = x.shape
    assert mask.shape == (B, 1, Sq, Sk)

    # Coerce ANY mask dtype to a {0,1} int8 mask: 4x less HBM traffic than f32
    # and makes the in-kernel select robust to arbitrary nonzero values.
    mask = (mask != 0).astype(jnp.int8)

    itemsize = jnp.dtype(x.dtype).itemsize
    vmem_cap = _vmem_capacity_bytes()
    if target_block_bytes is None:
        # bigger tiles on 128 MiB-VMEM parts (v5e/v6e), tighter on v7x (64 MiB)
        target_block_bytes = (4 << 20) if vmem_cap >= (100 << 20) else (2 << 20)

    # Pad Sk only when it is small AND lane-misaligned (fully-masked stores on a
    # mostly-empty lane group hurt); otherwise the block's last dim is the full
    # Sk, which is legal regardless of alignment and avoids two extra HBM passes.
    pad_sk = (Sk % 128 != 0) and (Sk < 256)
    skb = ((Sk + 127) // 128) * 128 if pad_sk else Sk
    if pad_sk:
        x = jnp.pad(x, ((0, 0), (0, 0), (0, 0), (0, skb - Sk)))
        mask = jnp.pad(mask, ((0, 0), (0, 0), (0, 0), (0, skb - Sk)))

    th, tq = _choose_tiles(H, Sq, skb, itemsize, target_block_bytes)
    nq = pl.cdiv(Sq, tq)
    nh = pl.cdiv(H, th)
    # heads innermost: the mask block index does not depend on h, so Pallas
    # fetches each mask tile once per (b, q) and re-uses it across heads.
    grid = (B, nq, nh)

    # True per-step footprint: double-buffered x/mask/out tiles plus the f32
    # softmax temporaries (s, e, reductions) the kernel materializes.
    tile_x = th * tq * skb * itemsize
    tile_m = tq * skb * 1
    f32_tile = th * tq * skb * 4
    need = 2 * (2 * tile_x + tile_m) + 4 * f32_tile + (2 << 20)
    vmem_limit = int(min(int(vmem_cap * 0.75), max(32 << 20, need)))

    kernel = functools.partial(
        _fused_scale_mask_softmax_kernel,
        scale=float(scale),
        sk_valid=(Sk if pad_sk else None),
        approx_reciprocal=approx_reciprocal,
    )

    io_aliases = {0: 0} if (alias_input and not pad_sk) else {}

    out = pl.pallas_call(
        kernel,
        out_shape=jax.ShapeDtypeStruct((B, H, Sq, skb), x.dtype),
        grid_spec=pltpu.PrefetchScalarGridSpec(
            num_scalar_prefetch=0,
            grid=grid,
            in_specs=[
                # x: one (th, tq, skb) slab per grid step
                pl.BlockSpec((1, th, tq, skb), lambda b, q, h: (b, h, q, 0)),
                # mask: head-invariant -> fetched once per (b, q)
                pl.BlockSpec((1, 1, tq, skb), lambda b, q, h: (b, 0, q, 0)),
            ],
            out_specs=pl.BlockSpec((1, th, tq, skb), lambda b, q, h: (b, h, q, 0)),
        ),
        compiler_params=pltpu.CompilerParams(
            # head axis "arbitrary" so megacore sharding (v7x) lands on (B, q)
            # and keeps the head-invariant mask tile resident per core.
            dimension_semantics=("parallel", "parallel", "arbitrary"),
            vmem_limit_bytes=vmem_limit,
        ),
        input_output_aliases=io_aliases,
    )(x, mask)

    if pad_sk:
        out = out[:, :, :, :Sk]
    return out


def _reference(x, mask, scale):
    # canonical masked_fill semantics of the PyTorch fused op
    xf = x.astype(jnp.float32) * scale
    xf = jnp.where(mask.astype(bool), MASK_FILL_VALUE, xf)
    return jax.nn.softmax(xf, axis=-1).astype(x.dtype)


if __name__ == "__main__":
    key = jax.random.PRNGKey(0)

    # --- main check: small shape consistent with the module's attention scores
    B, H, Sq, Sk = 2, 4, 16, 16
    scale = 0.125  # e.g. 1/sqrt(head_dim)
    kx, km, kx2, km2 = jax.random.split(key, 4)
    x = jax.random.normal(kx, (B, H, Sq, Sk), dtype=jnp.float32)
    mask = jax.random.uniform(km, (B, 1, Sq, Sk)) < 0.25  # True = masked out

    out = fused_scale_mask_softmax(x, mask, scale=scale)
    out = jax.block_until_ready(out)
    ref = _reference(x, mask, scale)
    assert out.shape == (B, H, Sq, Sk)
    # approx (EUP) reciprocal carries ~1e-3-level relative error.
    assert jnp.allclose(out, ref, atol=2e-3, rtol=2e-3), "mismatch vs reference"

    # --- second check: no-pad path (Sk % 128 == 0), ragged Sq tiling, odd H
    B2, H2, Sq2, Sk2 = 1, 3, 44, 256
    x2 = jax.random.normal(kx2, (B2, H2, Sq2, Sk2), dtype=jnp.float32)
    mask2 = (jax.random.uniform(km2, (B2, 1, Sq2, Sk2)) < 0.1).astype(jnp.float32)
    out2 = fused_scale_mask_softmax(x2, mask2, scale=0.1,
                                    target_block_bytes=8 * 1024)  # force Sq tiling
    out2 = jax.block_until_ready(out2)
    ref2 = _reference(x2, mask2, 0.1)
    assert out2.shape == (B2, H2, Sq2, Sk2)
    assert jnp.allclose(out2, ref2, atol=2e-3, rtol=2e-3), "mismatch vs reference (2)"

    print("KERNEL_OK")
</pallas_src>

<mosaic_0001>
module attributes {stable_mosaic.version = 11 : i64} {
  func.func @_fused_scale_mask_softmax_kernel(%arg0: i32, %arg1: i32, %arg2: i32, %arg3: memref<1x4x16x128xf32, #tpu.memory_space<vmem>>, %arg4: memref<1x1x16x128xi8, #tpu.memory_space<vmem>>, %arg5: memref<1x4x16x128xf32, #tpu.memory_space<vmem>>) attributes {dimension_semantics = [#tpu.dimension_semantics<parallel>, #tpu.dimension_semantics<parallel>, #tpu.dimension_semantics<arbitrary>], iteration_bounds = array<i64: 2, 1, 1>, scalar_prefetch = 0 : i64, scratch_operands = 0 : i64, tpu.core_type = #tpu.core_type<tc>, window_params = [{transform_indices = @transform_0, window_bounds = array<i64: 1, 4, 16, 128>}, {transform_indices = @transform_1, window_bounds = array<i64: 1, 1, 16, 128>}, {transform_indices = @transform_2, window_bounds = array<i64: 1, 4, 16, 128>}]} {
    %c0 = arith.constant 0 : index
    %c0_0 = arith.constant 0 : index
    %c0_1 = arith.constant 0 : index
    %c0_2 = arith.constant 0 : index
    %0 = vector.load %arg3[%c0, %c0_0, %c0_1, %c0_2] : memref<1x4x16x128xf32, #tpu.memory_space<vmem>>, vector<1x4x16x128xf32>
    %cst = arith.constant 1.250000e-01 : f32
    %1 = vector.broadcast %cst : f32 to vector<1x4x16x128xf32>
    %2 = arith.mulf %0, %1 : vector<1x4x16x128xf32>
    %c0_3 = arith.constant 0 : index
    %c0_4 = arith.constant 0 : index
    %c0_5 = arith.constant 0 : index
    %c0_6 = arith.constant 0 : index
    %3 = vector.load %arg4[%c0_3, %c0_4, %c0_5, %c0_6] : memref<1x1x16x128xi8, #tpu.memory_space<vmem>>, vector<1x1x16x128xi8>
    %c0_i8 = arith.constant 0 : i8
    %4 = vector.broadcast %c0_i8 : i8 to vector<1x1x16x128xi8>
    %5 = arith.cmpi ne, %3, %4 : vector<1x1x16x128xi8>
    %cst_7 = arith.constant -1.000000e+04 : f32
    %6 = vector.shape_cast %5 : vector<1x1x16x128xi1> to vector<1x1x16x128xi1>
    %7 = vector.broadcast %6 : vector<1x1x16x128xi1> to vector<1x4x16x128xi1>
    %8 = vector.broadcast %cst_7 : f32 to vector<1x4x16x128xf32>
    %9 = arith.select %7, %8, %2 : vector<1x4x16x128xi1>, vector<1x4x16x128xf32>
    %10 = tpu.iota {dimensions = array<i32: 3>} : vector<1x4x16x128xi32>
    %c16_i32 = arith.constant 16 : i32
    %11 = vector.broadcast %c16_i32 : i32 to vector<1x4x16x128xi32>
    %12 = arith.cmpi slt, %10, %11 : vector<1x4x16x128xi32>
    %cst_8 = arith.constant 0xFF800000 : f32
    %13 = vector.broadcast %cst_8 : f32 to vector<1x4x16x128xf32>
    %14 = arith.select %12, %9, %13 : vector<1x4x16x128xi1>, vector<1x4x16x128xf32>
    %cst_9 = arith.constant dense<0xFF800000> : vector<1x4x16xf32>
    %15 = vector.multi_reduction <maximumf>, %14, %cst_9 [3] : vector<1x4x16x128xf32> to vector<1x4x16xf32>
    %16 = vector.shape_cast %15 : vector<1x4x16xf32> to vector<1x4x16x1xf32>
    %17 = vector.broadcast %16 : vector<1x4x16x1xf32> to vector<1x4x16x128xf32>
    %18 = arith.subf %14, %17 : vector<1x4x16x128xf32>
    %19 = math.exp %18 : vector<1x4x16x128xf32>
    %cst_10 = arith.constant dense<0.000000e+00> : vector<1x4x16xf32>
    %20 = vector.multi_reduction <add>, %19, %cst_10 [3] : vector<1x4x16x128xf32> to vector<1x4x16xf32>
    %21 = vector.shape_cast %20 : vector<1x4x16xf32> to vector<1x4x16x1xf32>
    %22 = tpu.reciprocal %21 {approx = true} : vector<1x4x16x1xf32> -> vector<1x4x16x1xf32>
    %23 = vector.broadcast %22 : vector<1x4x16x1xf32> to vector<1x4x16x128xf32>
    %24 = arith.mulf %19, %23 : vector<1x4x16x128xf32>
    %c0_11 = arith.constant 0 : index
    %c0_12 = arith.constant 0 : index
    %c0_13 = arith.constant 0 : index
    %c0_14 = arith.constant 0 : index
    %25 = vector.load %arg5[%c0_11, %c0_12, %c0_13, %c0_14] : memref<1x4x16x128xf32, #tpu.memory_space<vmem>>, vector<1x4x16x128xf32>
    tpu.vector_store %arg5[%c0_11, %c0_12, %c0_13, %c0_14], %24 {strides = array<i32>} : memref<1x4x16x128xf32, #tpu.memory_space<vmem>>, vector<1x4x16x128xf32>,
    return
  }
  func.func @transform_0(%arg0: i32, %arg1: i32, %arg2: i32) -> (i32, i32, i32, i32) {
    %c0_i32 = arith.constant 0 : i32
    %c0_i32_0 = arith.constant 0 : i32
    return %arg0, %arg2, %arg1, %c0_i32 : i32, i32, i32, i32
  }
  func.func @transform_1(%arg0: i32, %arg1: i32, %arg2: i32) -> (i32, i32, i32, i32) {
    %c0_i32 = arith.constant 0 : i32
    %c0_i32_0 = arith.constant 0 : i32
    %c0_i32_1 = arith.constant 0 : i32
    return %arg0, %c0_i32, %arg1, %c0_i32_0 : i32, i32, i32, i32
  }
  func.func @transform_2(%arg0: i32, %arg1: i32, %arg2: i32) -> (i32, i32, i32, i32) {
    %c0_i32 = arith.constant 0 : i32
    %c0_i32_0 = arith.constant 0 : i32
    return %arg0, %arg2, %arg1, %c0_i32 : i32, i32, i32, i32
  }
}

</mosaic_0001>

<llo_original>
// kernel: tpu_custom_call.1
$region0: #{tpu_custom_call.1}
  #allocation0 [shape = 'u32[]', space=smem, size = 0x4, offset = 0x4, fixed_abs, tag = 'smem constant byte address 0x4 - core index']
  #allocation1 [shape = 'u32[144,128]{1,0:T(1,128)}', space=vmem, size = 0x12000, scoped, tag = 'internal scratch']
  %s0 = inlined_call_operand.hbm [shape: f32[2,4,16,128], index: 0, kind: input, shape index: {}]
  %s1 = inlined_call_operand.hbm [shape: s8[2,1,16,128], index: 1, kind: input, shape index: {}]
  %s2 = inlined_call_operand.hbm [shape: f32[2,4,16,128], index: 2, kind: output, shape index: {}]
  %s3 = sld [smem:[#allocation0]]
  $region49: #{tpu_custom_call.1} parent=0
    _
  %s5 = ssub.s32 1, %s3
  %s6 = scalar_select 0, %s5, %s3
  $region1: #{tpu_custom_call.1} parent=0
    #allocation2 [shape = 'u8[65536]{0}', space=vmem, size = 0x10000, scoped, tag = 'input window, operand 0']
    #allocation3 [shape = 's32[2]{0}', space=sflag, size = 0x8, scoped, tag = 'scoped memory for tpu_custom_call.1']
    #allocation4 [shape = 's32[2]{0}', space=sflag, size = 0x8, scoped, tag = 'scoped memory for tpu_custom_call.1']
    #allocation5 [shape = 'u8[4096]{0}', space=vmem, size = 0x1000, scoped, tag = 'input window, operand 1']
    #allocation6 [shape = 's32[2]{0}', space=sflag, size = 0x8, scoped, tag = 'scoped memory for tpu_custom_call.1']
    #allocation7 [shape = 'u8[65536]{0}', space=vmem, size = 0x10000, scoped, tag = 'output window, operand 0']
    %7 = vsyncpa [#allocation3], 0
    %s8 = scalar_lea.sflag [#allocation3], 1
    %9 = vsyncpa %s8, 0
    %10 = vsyncpa [#allocation6], 0
    %s11 = scalar_lea.sflag [#allocation6], 1
    %12 = vsyncpa %s11, 0
    %13 = vsyncpa [#allocation4], 0
    %s14 = scalar_lea.sflag [#allocation4], 1
    %15 = vsyncpa %s14, 0
    loop: start=0, step=1, limit=4
    $region2: #{tpu_custom_call.1} parent=1 // loop_pre_header
      _
    $region3: #{tpu_custom_call.1} parent=1 // loop_header
      %s17 = sphi 0, %s21
      %p18 = scmp.ge.s32.totalorder %s17, 4
      %s24 = sphi 0, %s43
      %s25 = sphi 0, %s39
      %s26 = sphi 0, %s35
      %s27 = sphi 0, %s24
      %s28 = sphi 0, %s25
      %s29 = sphi 0, %s26
      %s30 = sphi 0, %s27
      %s31 = sphi 0, %s28
      %s32 = sphi 0, %s29
      %s50 = sphi 0, %s52
      %s53 = sphi 0, %s50
      %s54 = sphi 0, %s53
      %s70 = sphi 0, %s54
      %s78 = sphi 0, %s80
      %s81 = sphi 0, %s78
      %s82 = sphi 0, %s81
      %s98 = sphi 0, %s82
      %s108 = sphi 0, %s110
      %s111 = sphi 0, %s108
      %s112 = sphi 0, %s111
      %s128 = sphi 0, %s112
    $region4: #{tpu_custom_call.1} parent=1 // loop_header_branch
      %20 = sbr.rel (%p18) target = $region8
    $region5: #{tpu_custom_call.1} parent=1 // loop_body
      %s22 = ssub.s32 %s17, 1
      %s23 = ssub.s32 %s17, 2
      %s33 = sadd.s32 1, %s26
      %p34 = scmp.ge.s32.totalorder %s33, 1
      %s35 = scalar_select %p34, 0, %s33
      %s36 = sadd.s32 1, %s25
      %s37 = scalar_select %p34, %s36, %s25
      %p38 = scmp.ge.s32.totalorder %s37, 1
      %s39 = scalar_select %p38, 0, %s37
      %s40 = sadd.s32 1, %s24
      %s41 = scalar_select %p38, %s40, %s24
      %p42 = scmp.ge.s32.totalorder %s41, 2
      %s43 = scalar_select %p42, 0, %s41
      %s44 = ssub.s32 %s24, %s43
      %s45 = ssub.s32 %s26, %s35
      %s46 = sor.u32 %s44, %s45
      %s47 = ssub.s32 %s25, %s39
      %s48 = sor.u32 %s46, %s47
      %p49 = scmp.eq.s32.totalorder %s48, 0
      %s51 = sadd.s32 %s50, 1
      %s52 = scalar_select %p49, %s50, %s51
      %p55 = pneg %p49
      %p56 = scmp.eq.s32.totalorder %s17, 1
      %p57 = por %p55, %p56
      %p58 = scmp.ne.s32.totalorder %s50, %s53
      %p59 = scmp.eq.s32.totalorder %s17, 0
      %p60 = por %p58, %p59
      %p61 = scmp.ne.s32.totalorder %s50, %s53
      %p62 = scmp.eq.s32.totalorder %s22, 1
      %p63 = por %p61, %p62
      %p64 = scmp.ne.s32.totalorder %s53, %s54
      %p65 = scmp.eq.s32.totalorder %s22, 0
      %p66 = por %p64, %p65
      %p67 = scmp.ne.s32.totalorder %s53, %s54
      %p68 = scmp.eq.s32.totalorder %s23, 1
      %p69 = por %p67, %p68
      %p71 = scmp.ne.s32.totalorder %s54, %s70
      %p72 = scmp.eq.s32.totalorder %s23, 0
      %p73 = por %p71, %p72
      %s74 = ssub.s32 %s24, %s43
      %s75 = ssub.s32 %s25, %s39
      %s76 = sor.u32 %s74, %s75
      %p77 = scmp.eq.s32.totalorder %s76, 0
      %s79 = sadd.s32 %s78, 1
      %s80 = scalar_select %p77, %s78, %s79
      %p83 = pneg %p77
      %p84 = scmp.eq.s32.totalorder %s17, 1
      %p85 = por %p83, %p84
      %p86 = scmp.ne.s32.totalorder %s78, %s81
      %p87 = scmp.eq.s32.totalorder %s17, 0
      %p88 = por %p86, %p87
      %p89 = scmp.ne.s32.totalorder %s78, %s81
      %p90 = scmp.eq.s32.totalorder %s22, 1
      %p91 = por %p89, %p90
      %p92 = scmp.ne.s32.totalorder %s81, %s82
      %p93 = scmp.eq.s32.totalorder %s22, 0
      %p94 = por %p92, %p93
      %p95 = scmp.ne.s32.totalorder %s81, %s82
      %p96 = scmp.eq.s32.totalorder %s23, 1
      %p97 = por %p95, %p96
      %p99 = scmp.ne.s32.totalorder %s82, %s98
      %p100 = scmp.eq.s32.totalorder %s23, 0
      %p101 = por %p99, %p100
      %s102 = ssub.s32 %s24, %s43
      %s103 = ssub.s32 %s26, %s35
      %s104 = sor.u32 %s102, %s103
      %s105 = ssub.s32 %s25, %s39
      %s106 = sor.u32 %s104, %s105
      %p107 = scmp.eq.s32.totalorder %s106, 0
      %s109 = sadd.s32 %s108, 1
      %s110 = scalar_select %p107, %s108, %s109
      %p113 = pneg %p107
      %p114 = scmp.eq.s32.totalorder %s17, 1
      %p115 = por %p113, %p114
      %p116 = scmp.ne.s32.totalorder %s108, %s111
      %p117 = scmp.eq.s32.totalorder %s17, 0
      %p118 = por %p116, %p117
      %p119 = scmp.ne.s32.totalorder %s108, %s111
      %p120 = scmp.eq.s32.totalorder %s22, 1
      %p121 = por %p119, %p120
      %p122 = scmp.ne.s32.totalorder %s111, %s112
      %p123 = scmp.eq.s32.totalorder %s22, 0
      %p124 = por %p122, %p123
      %p125 = scmp.ne.s32.totalorder %s111, %s112
      %p126 = scmp.eq.s32.totalorder %s23, 1
      %p127 = por %p125, %p126
      %p129 = scmp.ne.s32.totalorder %s112, %s128
      %p130 = scmp.eq.s32.totalorder %s23, 0
      %p131 = por %p129, %p130
      %p132 = scmp.le.s32.totalorder 1, %s17
      %p133 = scmp.lt.s32.totalorder %s17, 3
      %p134 = pnand %p132, %p133
      %p135 = pneg %p134
      // Predicated region
      $region9: #{tpu_custom_call.1} parent=5 // pred_check
        _
      $region10: #{tpu_custom_call.1} parent=5 // pred_check_branch
        %137 = sbr.rel (%p134) target = $region12
      $region11: #{tpu_custom_call.1} parent=5 // pred_region
        %s138 = ssub.s32 %s17, 1
      $region12: #{tpu_custom_call.1} parent=5 // pred_fallthru
        _
      %p139 = scmp.lt.s32.totalorder %s17, 2
      // Predicated region
      $region13: #{tpu_custom_call.1} parent=5 // pred_check
        %p140 = pneg %p139
      $region14: #{tpu_custom_call.1} parent=5 // pred_check_branch
        %142 = sbr.rel (%p140) target = $region16
      $region15: #{tpu_custom_call.1} parent=5 // pred_region
        // Predicated region
        $region17: #{tpu_custom_call.1} parent=15 // pred_check
          %p143 = pneg %p60
        $region18: #{tpu_custom_call.1} parent=15 // pred_check_branch
          %145 = sbr.rel (%p143) target = $region20
        $region19: #{tpu_custom_call.1} parent=15 // pred_region
          %s146 = sand.u32 %s50, 1
          %s147 = scalar_lea.sflag [#allocation3], %s146
          %s148 = sand.u32 %s50, 1
          %s149 = smul.addr %s148, 64
          %s150 = scalar_lea.vmem [#allocation2], %s149
          %s151 = smul.u32 4, %s26
          %s152 = smul.u32 2, %s25
          %s154 = ssub.s32 1024, 1024
          %155 = vsyncadd %s147, %s154
          %s156 = smul.addr %s151, 2
          %s157 = sadd.s32 %s152, %s156
          %s158 = smul.addr %s24, 8
          %s159 = sadd.s32 %s157, %s158
          %s160 = smul.addr %s159, 128
          %s161 = scalar_lea.hbm %s0, %s160
          %s162 = sshll.u32 %s150, 4
          %s163 = int_to_ptr.vmem [resolvable:$true] %s162
          %168 = dma.hbm_to_vmem [thread:$0]  %s161, 1024, %s163, %s147, 128, 128, 8
        $region20: #{tpu_custom_call.1} parent=15 // pred_fallthru
          _
        // Predicated region
        $region21: #{tpu_custom_call.1} parent=15 // pred_check
          %p169 = pneg %p88
        $region22: #{tpu_custom_call.1} parent=15 // pred_check_branch
          %171 = sbr.rel (%p169) target = $region24
        $region23: #{tpu_custom_call.1} parent=15 // pred_region
          %s172 = sand.u32 %s78, 1
          %s173 = scalar_lea.sflag [#allocation6], %s172
          %s174 = sand.u32 %s78, 1
          %s175 = smul.addr %s174, 4
          %s176 = scalar_lea.vmem [#allocation5], %s175
          %s177 = smul.u32 2, %s25
          %s179 = ssub.s32 64, 64
          %180 = vsyncadd %s173, %s179
          %s181 = smul.addr %s24, 2
          %s182 = sadd.s32 %s177, %s181
          %s183 = smul.addr %s182, 32
          %s184 = scalar_lea.hbm %s1, %s183
          %s185 = sshll.u32 %s176, 4
          %s186 = int_to_ptr.vmem [resolvable:$true] %s185
          %191 = dma.hbm_to_vmem [thread:$0]  %s184, 64, %s186, %s173, 32, 32, 2
        $region24: #{tpu_custom_call.1} parent=15 // pred_fallthru
          _
      $region16: #{tpu_custom_call.1} parent=5 // pred_fallthru
        _
      %p192 = scmp.le.s32.totalorder 1, %s17
      %p193 = scmp.lt.s32.totalorder %s17, 3
      %p194 = pnand %p192, %p193
      %p195 = pneg %p194
      // Predicated region
      $region25: #{tpu_custom_call.1} parent=5 // pred_check
        _
      $region26: #{tpu_custom_call.1} parent=5 // pred_check_branch
        %197 = sbr.rel (%p194) target = $region28
      $region27: #{tpu_custom_call.1} parent=5 // pred_region
        %s198 = ssub.s32 %s17, 1
        %s199 = sand.u32 %s53, 1
        %s200 = scalar_lea.sflag [#allocation3], %s199
        %s201 = sand.u32 %s53, 1
        %s202 = smul.addr %s201, 64
        %s203 = scalar_lea.vmem [#allocation2], %s202
        // Predicated region
        $region29: #{tpu_custom_call.1} parent=27 // pred_check
          %p204 = pneg %p66
        $region30: #{tpu_custom_call.1} parent=27 // pred_check_branch
          %206 = sbr.rel (%p204) target = $region32
        $region31: #{tpu_custom_call.1} parent=27 // pred_region
          %207 = dma.done %s200, 1024
        $region32: #{tpu_custom_call.1} parent=27 // pred_fallthru
          _
        %s208 = sand.u32 %s81, 1
        %s209 = scalar_lea.sflag [#allocation6], %s208
        %s210 = sand.u32 %s81, 1
        %s211 = smul.addr %s210, 4
        %s212 = scalar_lea.vmem [#allocation5], %s211
        // Predicated region
        $region33: #{tpu_custom_call.1} parent=27 // pred_check
          %p213 = pneg %p94
        $region34: #{tpu_custom_call.1} parent=27 // pred_check_branch
          %215 = sbr.rel (%p213) target = $region36
        $region35: #{tpu_custom_call.1} parent=27 // pred_region
          %216 = dma.done %s209, 64
        $region36: #{tpu_custom_call.1} parent=27 // pred_fallthru
          _
        %s217 = sand.u32 %s53, 1
        %s218 = scalar_lea.sflag [#allocation3], %s217
        %s219 = sand.u32 %s53, 1
        %s220 = smul.addr %s219, 64
        %s221 = scalar_lea.vmem [#allocation2], %s220
        %p222 = pneg %p66
        %p223 = pneg %p63
        %s224 = sand.u32 %s81, 1
        %s225 = scalar_lea.sflag [#allocation6], %s224
        %s226 = sand.u32 %s81, 1
        %s227 = smul.addr %s226, 4
        %s228 = scalar_lea.vmem [#allocation5], %s227
        %p229 = pneg %p94
        %p230 = pneg %p91
        %p231 = pneg %p124
        %p232 = pneg %p121
        %s233 = sand.u32 %s111, 1
        %s234 = scalar_lea.sflag [#allocation4], %s233
        %s235 = sand.u32 %s111, 1
        %s236 = smul.addr %s235, 64
        %s237 = scalar_lea.vmem [#allocation7], %s236
        %s238 = smul.u32 4, %s29
        %s239 = smul.u32 2, %s28
        %s240 = smul.u32 2, %s28
        %s241 = smul.u32 4, %s29
        %s242 = smul.u32 2, %s28
        %v245 = vld [vmem:[%s203] sm:$0xff]
        %v246 = vld [vmem:[%s203 + $0x8] sm:$0xff]
        %v247 = vld [vmem:[%s203 + $0x10] sm:$0xff]
        %v248 = vld [vmem:[%s203 + $0x18] sm:$0xff]
        %v249 = vld [vmem:[%s203 + $0x20] sm:$0xff]
        %v250 = vld [vmem:[%s203 + $0x28] sm:$0xff]
        %v251 = vld [vmem:[%s203 + $0x30] sm:$0xff]
        %v252 = vld [vmem:[%s203 + $0x38] sm:$0xff]
        %v253 = vmul.f32 %v245, 0.125
        %v254 = vmul.f32 %v246, 0.125
        %v255 = vmul.f32 %v247, 0.125
        %v256 = vmul.f32 %v248, 0.125
        %v257 = vmul.f32 %v249, 0.125
        %v258 = vmul.f32 %v250, 0.125
        %v259 = vmul.f32 %v251, 0.125
        %v260 = vmul.f32 %v252, 0.125
        %v261 = vld [vmem:[%s212] sm:$0x3]
        %v262 = vld [vmem:[%s212 + $0x2] sm:$0x3]
        %vm263 = vnez %v261
        %vm264 = vnez %v262
        %v265 = vsel %vm263, 16843009, 0
        %v266 = vsel %vm264, 16843009, 0
        %v267 = vunpack.c.0.s8 %v265
        %v268 = vunpack.c.0.s8 %v266
        %vm269 = vcmp.ne.s32.totalorder %v267, 0
        %vm270 = vcmp.ne.s32.totalorder %v268, 0
        %v271 = vsel %vm269, 1, 0
        %v272 = vsel %vm270, 1, 0
        %vm273 = vcmp.eq.s32.totalorder %v271, 1
        %vm274 = vcmp.eq.s32.totalorder %v272, 1
        %v275 = vsel %vm273, -10000.0, %v253
        %v276 = vsel %vm274, -10000.0, %v254
        %v277 = vsel %vm273, -10000.0, %v255
        %v278 = vsel %vm274, -10000.0, %v256
        %v279 = vsel %vm273, -10000.0, %v257
        %v280 = vsel %vm274, -10000.0, %v258
        %v281 = vsel %vm273, -10000.0, %v259
        %v282 = vsel %vm274, -10000.0, %v260
        %v283 = vlaneseq
        %v284 = vand.u32 %v283, 127
        %vm285 = vcmp.lt.s32.totalorder %v284, 16
        %v286 = vsel %vm285, %v275, -inf
        %v287 = vsel %vm285, %v276, -inf
        %v288 = vsel %vm285, %v277, -inf
        %v289 = vsel %vm285, %v278, -inf
        %v290 = vsel %vm285, %v279, -inf
        %v291 = vsel %vm285, %v280, -inf
        %v292 = vsel %vm285, %v281, -inf
        %v293 = vsel %vm285, %v282, -inf
        %294 = vmax.xlane.f32.xlu0 %v286
        %v295 = vpop.xlane.xlu0 %294
        %296 = vmax.xlane.f32.xlu0 %v287
        %v297 = vpop.xlane.xlu0 %296
        %298 = vmax.xlane.f32.xlu0 %v288
        %v299 = vpop.xlane.xlu0 %298
        %300 = vmax.xlane.f32.xlu0 %v289
        %v301 = vpop.xlane.xlu0 %300
        %302 = vmax.xlane.f32.xlu0 %v290
        %v303 = vpop.xlane.xlu0 %302
        %304 = vmax.xlane.f32.xlu0 %v291
        %v305 = vpop.xlane.xlu0 %304
        %306 = vmax.xlane.f32.xlu0 %v292
        %v307 = vpop.xlane.xlu0 %306
        %308 = vmax.xlane.f32.xlu0 %v293
        %v309 = vpop.xlane.xlu0 %308
        %v310 = vsub.f32 %v286, %v295
        %v311 = vsub.f32 %v287, %v297
        %v312 = vsub.f32 %v288, %v299
        %v313 = vsub.f32 %v289, %v301
        %v314 = vsub.f32 %v290, %v303
        %v315 = vsub.f32 %v291, %v305
        %v316 = vsub.f32 %v292, %v307
        %v317 = vsub.f32 %v293, %v309
        %v318 = vmul.f32 %v310, 1.442695
        %v319 = vpow.pop %v318
        %v320 = vmul.f32 %v311, 1.442695
        %v321 = vpow.pop %v320
        %v322 = vmul.f32 %v312, 1.442695
        %v323 = vpow.pop %v322
        %v324 = vmul.f32 %v313, 1.442695
        %v325 = vpow.pop %v324
        %v326 = vmul.f32 %v314, 1.442695
        %v327 = vpow.pop %v326
        %v328 = vmul.f32 %v315, 1.442695
        %v329 = vpow.pop %v328
        %v330 = vmul.f32 %v316, 1.442695
        %v331 = vpow.pop %v330
        %v332 = vmul.f32 %v317, 1.442695
        %v333 = vpow.pop %v332
        %334 = vadd.xlane.f32.xlu0 %v319
        %v335 = vpop.xlane.xlu0 %334
        %336 = vadd.xlane.f32.xlu0 %v321
        %v337 = vpop.xlane.xlu0 %336
        %338 = vadd.xlane.f32.xlu0 %v323
        %v339 = vpop.xlane.xlu0 %338
        %340 = vadd.xlane.f32.xlu0 %v325
        %v341 = vpop.xlane.xlu0 %340
        %342 = vadd.xlane.f32.xlu0 %v327
        %v343 = vpop.xlane.xlu0 %342
        %344 = vadd.xlane.f32.xlu0 %v329
        %v345 = vpop.xlane.xlu0 %344
        %346 = vadd.xlane.f32.xlu0 %v331
        %v347 = vpop.xlane.xlu0 %346
        %348 = vadd.xlane.f32.xlu0 %v333
        %v349 = vpop.xlane.xlu0 %348
        %v350 = vrcp.pop %v335
        %v351 = vrcp.pop %v337
        %v352 = vrcp.pop %v339
        %v353 = vrcp.pop %v341
        %v354 = vrcp.pop %v343
        %v355 = vrcp.pop %v345
        %v356 = vrcp.pop %v347
        %v357 = vrcp.pop %v349
        %v358 = vmul.f32 %v319, %v350
        %v359 = vmul.f32 %v321, %v351
        %v360 = vmul.f32 %v323, %v352
        %v361 = vmul.f32 %v325, %v353
        %v362 = vmul.f32 %v327, %v354
        %v363 = vmul.f32 %v329, %v355
        %v364 = vmul.f32 %v331, %v356
        %v365 = vmul.f32 %v333, %v357
        %366 = vst [vmem:[%s237] sm:$0xff] %v358
        %367 = vst [vmem:[%s237 + $0x8] sm:$0xff] %v359
        %368 = vst [vmem:[%s237 + $0x10] sm:$0xff] %v360
        %369 = vst [vmem:[%s237 + $0x18] sm:$0xff] %v361
        %370 = vst [vmem:[%s237 + $0x20] sm:$0xff] %v362
        %371 = vst [vmem:[%s237 + $0x28] sm:$0xff] %v363
        %372 = vst [vmem:[%s237 + $0x30] sm:$0xff] %v364
        %373 = vst [vmem:[%s237 + $0x38] sm:$0xff] %v365
        %s374 = sand.u32 %s111, 1
        %s375 = scalar_lea.sflag [#allocation4], %s374
        %s376 = sand.u32 %s111, 1
        %s377 = smul.addr %s376, 64
        %s378 = scalar_lea.vmem [#allocation7], %s377
        // Predicated region
        $region37: #{tpu_custom_call.1} parent=27 // pred_check
          %p379 = pneg %p121
        $region38: #{tpu_custom_call.1} parent=27 // pred_check_branch
          %381 = sbr.rel (%p379) target = $region40
        $region39: #{tpu_custom_call.1} parent=27 // pred_region
          %s382 = smul.u32 4, %s29
          %s383 = smul.u32 2, %s28
          %s385 = ssub.s32 1024, 1024
          %386 = vsyncadd %s375, %s385
          %s387 = smul.addr %s382, 2
          %s388 = sadd.s32 %s383, %s387
          %s389 = smul.addr %s27, 8
          %s390 = sadd.s32 %s388, %s389
          %s391 = smul.addr %s390, 128
          %s392 = scalar_lea.hbm %s2, %s391
          %s393 = sshll.u32 %s378, 4
          %s394 = int_to_ptr.vmem [resolvable:$true] %s393
          %399 = dma.vmem_to_hbm [thread:$0]  %s394, 1024, %s392, %s375, 128, 128, 8
        $region40: #{tpu_custom_call.1} parent=27 // pred_fallthru
          _
      $region28: #{tpu_custom_call.1} parent=5 // pred_fallthru
        _
      %p400 = scmp.le.s32.totalorder 2, %s17
      // Predicated region
      $region41: #{tpu_custom_call.1} parent=5 // pred_check
        %p401 = pneg %p400
      $region42: #{tpu_custom_call.1} parent=5 // pred_check_branch
        %403 = sbr.rel (%p401) target = $region44
      $region43: #{tpu_custom_call.1} parent=5 // pred_region
        %s404 = ssub.s32 %s17, 2
        // Predicated region
        $region45: #{tpu_custom_call.1} parent=43 // pred_check
          %p405 = pneg %p127
        $region46: #{tpu_custom_call.1} parent=43 // pred_check_branch
          %407 = sbr.rel (%p405) target = $region48
        $region47: #{tpu_custom_call.1} parent=43 // pred_region
          %s408 = sand.u32 %s112, 1
          %s409 = scalar_lea.sflag [#allocation4], %s408
          %s410 = sand.u32 %s112, 1
          %s411 = smul.addr %s410, 64
          %s412 = scalar_lea.vmem [#allocation7], %s411
          %413 = dma.done %s409, 1024
        $region48: #{tpu_custom_call.1} parent=43 // pred_fallthru
          _
      $region44: #{tpu_custom_call.1} parent=5 // pred_fallthru
        _
    $region6: #{tpu_custom_call.1} parent=1 // loop_footer
      %s21 = sadd.s32 1, %s17
    $region7: #{tpu_custom_call.1} parent=1 // loop_footer_branch
      %16 = sbr.rel target = $region3
    $region8: #{tpu_custom_call.1} parent=1 // loop_exit
      _
    %414 = vsyncpa [#allocation3], 1
    %s415 = scalar_lea.sflag [#allocation3], 1
    %416 = vsyncpa %s415, 1
    %417 = vsyncpa [#allocation6], 1
    %s418 = scalar_lea.sflag [#allocation6], 1
    %419 = vsyncpa %s418, 1
    %420 = vsyncpa [#allocation4], 1
    %s421 = scalar_lea.sflag [#allocation4], 1
    %422 = vsyncpa %s421, 1

</llo_original>
